<compile_context>
chip_gen: v7x
topology: tpu7x:2x2x1
jax: 0.10.0
libtpu: 0.0.40
codegen_flags: <defaults>
</compile_context>

<pallas_src>
import numpy as np
import jax
import jax.numpy as jnp
from jax import lax
from jax.experimental import pallas as pl
from jax.experimental.pallas import tpu as pltpu

BAND_MEAN = 1440.0
BAND_STD = 600.0


def bandconcat_kernel(spec_ref, band_ref, out_ref):
    """out[b, s, 0] = spectra[b, s, 0];  out[b, s, 1] = (banddef[s] - mean) / std."""
    # Channel selector generated in-kernel (no constant matrices shipped from HBM).
    ch = lax.broadcasted_iota(jnp.int32, out_ref.shape, dimension=out_ref.ndim - 1)
    # spec_ref: (bt, S, 1), band_ref: (1, S, 1); both broadcast onto (bt, S, 2).
    out_ref[...] = jnp.where(ch == 0, spec_ref[...], band_ref[...])


def band_concat(spectra, banddef_norm, *, batch_tile=None):
    """BandConcat forward. spectra (B, S, 1) f32; banddef_norm (1, S, 1) pre-normalized."""
    Bn, Sn, _ = spectra.shape
    if batch_tile is None:
        batch_tile = Bn                     # single grid step at toy sizes
    assert Bn % batch_tile == 0
    nb = Bn // batch_tile
    return pl.pallas_call(
        bandconcat_kernel,
        out_shape=jax.ShapeDtypeStruct((Bn, Sn, 2), spectra.dtype),
        grid=(nb,),
        in_specs=[
            pl.BlockSpec((batch_tile, Sn, 1), lambda b: (b, 0, 0)),
            pl.BlockSpec((1, Sn, 1), lambda b: (0, 0, 0)),
        ],
        out_specs=pl.BlockSpec((batch_tile, Sn, 2), lambda b: (b, 0, 0)),
        compiler_params=pltpu.CompilerParams(dimension_semantics=("parallel",)),
    )(spectra, banddef_norm)


def prepare_banddef(banddef, mean=BAND_MEAN, std=BAND_STD):
    """Mirror of BandConcat.__init__: normalize once, store as (1, S, 1)."""
    band = (jnp.asarray(banddef, jnp.float32) - mean) / std
    return band.reshape(1, -1, 1)


# ----------------------- pure-JAX reference (module semantics) -----------------
def bandconcat_reference(spectra, banddef, mean=BAND_MEAN, std=BAND_STD):
    band = (banddef - mean) / std
    band = jnp.broadcast_to(band[None, :, None], spectra.shape)
    return jnp.concatenate([spectra, band], axis=-1)


if __name__ == "__main__":
    B, S = 2, 8
    key = jax.random.PRNGKey(0)
    spectra = jax.random.normal(key, (B, S, 1), dtype=jnp.float32)      # (b, s, 1)
    banddef = jnp.linspace(400.0, 2500.0, S, dtype=jnp.float32)         # band centers (nm)

    out = jax.block_until_ready(band_concat(spectra, prepare_banddef(banddef)))

    ref = jax.block_until_ready(bandconcat_reference(spectra, banddef))
    np.testing.assert_allclose(np.asarray(out), np.asarray(ref), rtol=1e-6, atol=1e-6)
    assert out.shape == (B, S, 2)

    print("KERNEL_OK")
</pallas_src>

<mosaic_0001>
module attributes {stable_mosaic.version = 11 : i64} {
  func.func @bandconcat_kernel(%arg0: i32, %arg1: memref<2x8x1xf32, #tpu.memory_space<vmem>>, %arg2: memref<1x8x1xf32, #tpu.memory_space<vmem>>, %arg3: memref<2x8x2xf32, #tpu.memory_space<vmem>>) attributes {dimension_semantics = [#tpu.dimension_semantics<parallel>], iteration_bounds = array<i64: 1>, scalar_prefetch = 0 : i64, scratch_operands = 0 : i64, tpu.core_type = #tpu.core_type<tc>, window_params = [{transform_indices = @transform_0, window_bounds = array<i64: 2, 8, 1>}, {pipeline_mode = #tpu.pipeline_mode<synchronous>, transform_indices = @transform_1, window_bounds = array<i64: 1, 8, 1>}, {transform_indices = @transform_2, window_bounds = array<i64: 2, 8, 2>}]} {
    %0 = tpu.iota {dimensions = array<i32: 2>} : vector<2x8x2xi32>
    %c0_i32 = arith.constant 0 : i32
    %1 = vector.broadcast %c0_i32 : i32 to vector<2x8x2xi32>
    %2 = arith.cmpi eq, %0, %1 : vector<2x8x2xi32>
    %c0 = arith.constant 0 : index
    %c0_0 = arith.constant 0 : index
    %c0_1 = arith.constant 0 : index
    %3 = vector.load %arg1[%c0, %c0_0, %c0_1] : memref<2x8x1xf32, #tpu.memory_space<vmem>>, vector<2x8x1xf32>
    %c0_2 = arith.constant 0 : index
    %c0_3 = arith.constant 0 : index
    %c0_4 = arith.constant 0 : index
    %4 = vector.load %arg2[%c0_2, %c0_3, %c0_4] : memref<1x8x1xf32, #tpu.memory_space<vmem>>, vector<1x8x1xf32>
    %5 = vector.shape_cast %3 : vector<2x8x1xf32> to vector<2x8x1xf32>
    %6 = vector.broadcast %5 : vector<2x8x1xf32> to vector<2x8x2xf32>
    %7 = vector.shape_cast %4 : vector<1x8x1xf32> to vector<1x8x1xf32>
    %8 = vector.broadcast %7 : vector<1x8x1xf32> to vector<2x8x2xf32>
    %9 = arith.select %2, %6, %8 : vector<2x8x2xi1>, vector<2x8x2xf32>
    %c0_5 = arith.constant 0 : index
    %c0_6 = arith.constant 0 : index
    %c0_7 = arith.constant 0 : index
    %10 = vector.load %arg3[%c0_5, %c0_6, %c0_7] : memref<2x8x2xf32, #tpu.memory_space<vmem>>, vector<2x8x2xf32>
    tpu.vector_store %arg3[%c0_5, %c0_6, %c0_7], %9 {strides = array<i32>} : memref<2x8x2xf32, #tpu.memory_space<vmem>>, vector<2x8x2xf32>,
    return
  }
  func.func @transform_0(%arg0: i32) -> (i32, i32, i32) {
    %c0_i32 = arith.constant 0 : i32
    %c0_i32_0 = arith.constant 0 : i32
    %c0_i32_1 = arith.constant 0 : i32
    return %arg0, %c0_i32, %c0_i32_0 : i32, i32, i32
  }
  func.func @transform_1(%arg0: i32) -> (i32, i32, i32) {
    %c0_i32 = arith.constant 0 : i32
    %c0_i32_0 = arith.constant 0 : i32
    %c0_i32_1 = arith.constant 0 : i32
    %c0_i32_2 = arith.constant 0 : i32
    return %c0_i32, %c0_i32_0, %c0_i32_1 : i32, i32, i32
  }
  func.func @transform_2(%arg0: i32) -> (i32, i32, i32) {
    %c0_i32 = arith.constant 0 : i32
    %c0_i32_0 = arith.constant 0 : i32
    %c0_i32_1 = arith.constant 0 : i32
    return %arg0, %c0_i32, %c0_i32_0 : i32, i32, i32
  }
}

</mosaic_0001>

<llo_original>
// kernel: tpu_custom_call.1
$region0: #{tpu_custom_call.1}
  #allocation0 [shape = 'u32[]', space=smem, size = 0x4, offset = 0x4, fixed_abs, tag = 'smem constant byte address 0x4 - core index']
  #allocation1 [shape = 'u32[144,128]{1,0:T(1,128)}', space=vmem, size = 0x12000, scoped, tag = 'internal scratch']
  %s0 = inlined_call_operand.vmem [shape: f32[2,8,1], index: 0, kind: input, shape index: {}]
  %s1 = inlined_call_operand.vmem [shape: f32[1,8,1], index: 1, kind: input, shape index: {}]
  %s2 = inlined_call_operand.vmem [shape: f32[2,8,2], index: 2, kind: output, shape index: {}]
  %s3 = sld [smem:[#allocation0]]
  $region18: #{tpu_custom_call.1} parent=0
    _
  %s5 = ssub.s32 1, %s3
  %s6 = scalar_select 0, %s5, %s3
  // Predicated region
  $region2: #{tpu_custom_call.1} parent=0 // pred_check
    _
  $region3: #{tpu_custom_call.1} parent=0 // pred_check_branch
    %8 = sbr.rel (0) target = $region5
  $region4: #{tpu_custom_call.1} parent=0 // pred_region
    _
  $region5: #{tpu_custom_call.1} parent=0 // pred_fallthru
    _
  // Predicated region
  $region6: #{tpu_custom_call.1} parent=0 // pred_check
    _
  $region7: #{tpu_custom_call.1} parent=0 // pred_check_branch
    %10 = sbr.rel (0) target = $region9
  $region8: #{tpu_custom_call.1} parent=0 // pred_region
    _
  $region9: #{tpu_custom_call.1} parent=0 // pred_fallthru
    _
  %v11 = vlaneseq
  %v12 = vand.u32 %v11, 127
  %vm13 = vcmp.eq.s32.totalorder %v12, 0
  %v14 = vld [vmem:[%s0] sm:$0xff]
  %v15 = vld [vmem:[%s0 + $0x8] sm:$0xff]
  %v16 = vld [vmem:[%s1] sm:$0xff]
  %18 = vset.pattern.permute.xlu0 0
  %19 = vperm.xlu0 %18, %v14
  %v20 = vpop.permute.xlu0 %19
  %23 = vset.pattern.permute.xlu0 0
  %24 = vperm.xlu0 %23, %v15
  %v25 = vpop.permute.xlu0 %24
  %28 = vset.pattern.permute.xlu0 0
  %29 = vperm.xlu0 %28, %v16
  %v30 = vpop.permute.xlu0 %29
  %v32 = vsel %vm13, %v20, %v30
  %v33 = vsel %vm13, %v25, %v30
  %vm34 = vcmask 15360
  %35 = vst.msk [vmem:[%s2] sm:$0xff] %vm34, %v32
  %36 = vst.msk [vmem:[%s2 + $0x8] sm:$0xff] %vm34, %v33
  // Predicated region
  $region10: #{tpu_custom_call.1} parent=0 // pred_check
    _
  $region11: #{tpu_custom_call.1} parent=0 // pred_check_branch
    %38 = sbr.rel (0) target = $region13
  $region12: #{tpu_custom_call.1} parent=0 // pred_region
    _
  $region13: #{tpu_custom_call.1} parent=0 // pred_fallthru
    _
  // Predicated region
  $region14: #{tpu_custom_call.1} parent=0 // pred_check
    _
  $region15: #{tpu_custom_call.1} parent=0 // pred_check_branch
    %40 = sbr.rel (0) target = $region17
  $region16: #{tpu_custom_call.1} parent=0 // pred_region
    _
  $region17: #{tpu_custom_call.1} parent=0 // pred_fallthru
    _

</llo_original>
